<compile_context>
chip_gen: v5e
topology: v5e:2x2
jax: 0.10.0
libtpu: 0.0.40
codegen_flags: <defaults>
</compile_context>

<pallas_src>
import math

import jax
import jax.numpy as jnp
from jax.experimental import pallas as pl
from jax.experimental.pallas import tpu as pltpu


def _round_up(x: int, m: int) -> int:
    return ((x + m - 1) // m) * m


def _factor_linear_kernel(x_ref, w_ref, b_ref, o_ref):
    # [TILE_N, D_in] @ [D_in, D_out_p] on the MXU, f32 accumulate.
    y = jnp.dot(x_ref[...], w_ref[...], preferred_element_type=jnp.float32)
    o_ref[...] = (y + b_ref[...]).astype(o_ref.dtype)


def _factor_linear_dropout_kernel(x_ref, w_ref, b_ref, m_ref, o_ref):
    y = jnp.dot(x_ref[...], w_ref[...], preferred_element_type=jnp.float32)
    y = (y + b_ref[...]) * m_ref[...]       # mask already holds {0, 1/(1-p)}
    o_ref[...] = y.astype(o_ref.dtype)


def factor_forward(x, w, b, *, p: float = 0.0, rng_key=None, tile_n: int = 512):
    """Factor.forward: dropout(x @ W + b).

    x: [..., D_in] float32
    w: [D_in, D_out]  (transpose of PyTorch's nn.Linear weight)
    b: [D_out]
    p: dropout probability (0.0 => eval mode / identity dropout)
    rng_key: jax PRNG key, required when p > 0.
    Returns [..., D_out] float32.
    """
    *lead, d_in = x.shape
    d_out = w.shape[1]
    n = int(math.prod(lead)) if lead else 1

    x2 = x.reshape(n, d_in).astype(jnp.float32)

    # Lane-dense output: pad D_out up to a multiple of 128.
    d_out_p = _round_up(d_out, 128)
    # Row tile: multiple of 8 sublanes, capped (v7x VMEM-friendly) at tile_n.
    tile_n = min(tile_n, _round_up(n, 8))
    n_p = _round_up(n, tile_n)

    if n_p != n:
        x2 = jnp.pad(x2, ((0, n_p - n), (0, 0)))
    w_p = w.astype(jnp.float32)
    b_p = b.astype(jnp.float32)
    if d_out_p != d_out:
        w_p = jnp.pad(w_p, ((0, 0), (0, d_out_p - d_out)))
        b_p = jnp.pad(b_p, (0, d_out_p - d_out))
    b_p = b_p.reshape(1, d_out_p)

    grid = (n_p // tile_n,)
    use_dropout = p > 0.0

    x_spec = pl.BlockSpec((tile_n, d_in), lambda i: (i, 0))
    w_spec = pl.BlockSpec((d_in, d_out_p), lambda i: (0, 0))   # resident
    b_spec = pl.BlockSpec((1, d_out_p), lambda i: (0, 0))      # resident
    o_spec = pl.BlockSpec((tile_n, d_out_p), lambda i: (i, 0))

    bytes_accessed = 4 * (n_p * d_in + d_in * d_out_p + d_out_p + n_p * d_out_p)
    inputs = [x2, w_p, b_p]
    in_specs = [x_spec, w_spec, b_spec]
    kernel = _factor_linear_kernel

    if use_dropout:
        if rng_key is None:
            raise ValueError("rng_key is required when dropout p > 0")
        if p >= 1.0:
            mask = jnp.zeros((n_p, d_out_p), jnp.float32)
        else:
            keep = jax.random.bernoulli(rng_key, 1.0 - p, (n_p, d_out_p))
            mask = keep.astype(jnp.float32) * (1.0 / (1.0 - p))
        inputs.append(mask)
        in_specs.append(pl.BlockSpec((tile_n, d_out_p), lambda i: (i, 0)))
        kernel = _factor_linear_dropout_kernel
        bytes_accessed += 4 * n_p * d_out_p

    out = pl.pallas_call(
        kernel,
        out_shape=jax.ShapeDtypeStruct((n_p, d_out_p), jnp.float32),
        grid=grid,
        in_specs=in_specs,
        out_specs=o_spec,
        compiler_params=pltpu.CompilerParams(
            dimension_semantics=("parallel",)),
        cost_estimate=pl.CostEstimate(
            flops=2 * n_p * d_in * d_out_p,
            transcendentals=0,
            bytes_accessed=bytes_accessed),
    )(*inputs)

    return out[:n, :d_out].reshape(*lead, d_out)


def init_factor_params(key, input_size: int, output_size: int):
    """Deterministic init matching nn.Linear's U(-1/sqrt(fan_in), 1/sqrt(fan_in))."""
    kw, kb = jax.random.split(key)
    bound = 1.0 / math.sqrt(input_size)
    # Stored as [D_in, D_out] (transpose of PyTorch's [out, in]).
    w = jax.random.uniform(kw, (input_size, output_size), jnp.float32,
                           minval=-bound, maxval=bound)
    b = jax.random.uniform(kb, (output_size,), jnp.float32,
                           minval=-bound, maxval=bound)
    return w, b


if __name__ == "__main__":
    input_size, output_size = 32, 24
    batch, seq = 2, 8
    dropout_p = 0.25

    key = jax.random.PRNGKey(0)
    kx, kp, kd = jax.random.split(key, 3)
    x = jax.random.normal(kx, (batch, seq, input_size), jnp.float32)
    w, b = init_factor_params(kp, input_size, output_size)

    # Training-mode forward (dropout active).
    y_train = factor_forward(x, w, b, p=dropout_p, rng_key=kd)
    jax.block_until_ready(y_train)

    # Eval-mode forward (dropout = identity) — checkable against pure JAX.
    y_eval = factor_forward(x, w, b, p=0.0)
    jax.block_until_ready(y_eval)

    ref = x @ w + b
    assert y_train.shape == (batch, seq, output_size)
    assert y_eval.shape == (batch, seq, output_size)
    assert jnp.allclose(y_eval, ref, atol=1e-4, rtol=1e-4)

    # Train-mode: every element is either 0 (dropped) or ref / (1 - p) (kept).
    scale = 1.0 / (1.0 - dropout_p)
    kept = y_train != 0
    assert jnp.allclose(jnp.where(kept, y_train, 0.0),
                        jnp.where(kept, scale * ref, 0.0),
                        atol=1e-3, rtol=1e-3)

    print("KERNEL_OK")
</pallas_src>

<mosaic_0001>
module attributes {stable_mosaic.version = 11 : i64} {
  func.func @_factor_linear_dropout_kernel(%arg0: i32, %arg1: memref<16x32xf32, #tpu.memory_space<vmem>>, %arg2: memref<32x128xf32, #tpu.memory_space<vmem>>, %arg3: memref<1x128xf32, #tpu.memory_space<vmem>>, %arg4: memref<16x128xf32, #tpu.memory_space<vmem>>, %arg5: memref<16x128xf32, #tpu.memory_space<vmem>>) attributes {dimension_semantics = [#tpu.dimension_semantics<parallel>], iteration_bounds = array<i64: 1>, scalar_prefetch = 0 : i64, scratch_operands = 0 : i64, tpu.core_type = #tpu.core_type<tc>, window_params = [{transform_indices = @transform_0, window_bounds = array<i64: 16, 32>}, {pipeline_mode = #tpu.pipeline_mode<synchronous>, transform_indices = @transform_1, window_bounds = array<i64: 32, 128>}, {pipeline_mode = #tpu.pipeline_mode<synchronous>, transform_indices = @transform_2, window_bounds = array<i64: 1, 128>}, {transform_indices = @transform_3, window_bounds = array<i64: 16, 128>}, {transform_indices = @transform_4, window_bounds = array<i64: 16, 128>}]} {
    %c0 = arith.constant 0 : index
    %c0_0 = arith.constant 0 : index
    %0 = vector.load %arg1[%c0, %c0_0] : memref<16x32xf32, #tpu.memory_space<vmem>>, vector<16x32xf32>
    %c0_1 = arith.constant 0 : index
    %c0_2 = arith.constant 0 : index
    %1 = vector.load %arg2[%c0_1, %c0_2] : memref<32x128xf32, #tpu.memory_space<vmem>>, vector<32x128xf32>
    %cst = arith.constant dense<0.000000e+00> : vector<16x128xf32>
    %2 = tpu.matmul %0, %1, %cst {dimension_numbers = #tpu.dot_dimension_numbers<[1], [0], [0], [1], [0, 0, 1, 1], [], []>} : vector<16x32xf32>, vector<32x128xf32>, vector<16x128xf32> -> vector<16x128xf32>
    %c0_3 = arith.constant 0 : index
    %c0_4 = arith.constant 0 : index
    %3 = vector.load %arg3[%c0_3, %c0_4] : memref<1x128xf32, #tpu.memory_space<vmem>>, vector<1x128xf32>
    %4 = vector.broadcast %3 : vector<1x128xf32> to vector<16x128xf32>
    %5 = arith.addf %2, %4 : vector<16x128xf32>
    %c0_5 = arith.constant 0 : index
    %c0_6 = arith.constant 0 : index
    %6 = vector.load %arg4[%c0_5, %c0_6] : memref<16x128xf32, #tpu.memory_space<vmem>>, vector<16x128xf32>
    %7 = arith.mulf %5, %6 : vector<16x128xf32>
    %c0_7 = arith.constant 0 : index
    %c0_8 = arith.constant 0 : index
    %8 = vector.load %arg5[%c0_7, %c0_8] : memref<16x128xf32, #tpu.memory_space<vmem>>, vector<16x128xf32>
    tpu.vector_store %arg5[%c0_7, %c0_8], %7 {strides = array<i32>} : memref<16x128xf32, #tpu.memory_space<vmem>>, vector<16x128xf32>,
    return
  }
  func.func @transform_0(%arg0: i32) -> (i32, i32) {
    %c0_i32 = arith.constant 0 : i32
    %c0_i32_0 = arith.constant 0 : i32
    return %arg0, %c0_i32 : i32, i32
  }
  func.func @transform_1(%arg0: i32) -> (i32, i32) {
    %c0_i32 = arith.constant 0 : i32
    %c0_i32_0 = arith.constant 0 : i32
    %c0_i32_1 = arith.constant 0 : i32
    return %c0_i32, %c0_i32_0 : i32, i32
  }
  func.func @transform_2(%arg0: i32) -> (i32, i32) {
    %c0_i32 = arith.constant 0 : i32
    %c0_i32_0 = arith.constant 0 : i32
    %c0_i32_1 = arith.constant 0 : i32
    return %c0_i32, %c0_i32_0 : i32, i32
  }
  func.func @transform_3(%arg0: i32) -> (i32, i32) {
    %c0_i32 = arith.constant 0 : i32
    %c0_i32_0 = arith.constant 0 : i32
    return %arg0, %c0_i32 : i32, i32
  }
  func.func @transform_4(%arg0: i32) -> (i32, i32) {
    %c0_i32 = arith.constant 0 : i32
    %c0_i32_0 = arith.constant 0 : i32
    return %arg0, %c0_i32 : i32, i32
  }
}

</mosaic_0001>

<llo_original>
// kernel: tpu_custom_call.1
$region0: #{tpu_custom_call.1}
  #allocation0 [shape = 'u32[]', space=smem, size = 0x4, offset = 0x4, fixed_abs, tag = 'smem constant byte address 0x4 - core index']
  #allocation1 [shape = 'u32[72,128]{1,0:T(1,128)}', space=vmem, size = 0x9000, scoped, tag = 'internal scratch']
  %s0 = inlined_call_operand.hbm [shape: f32[16,32], index: 0, kind: input, shape index: {}]
  %s1 = inlined_call_operand.hbm [shape: f32[32,128], index: 1, kind: input, shape index: {}]
  %s2 = inlined_call_operand.vmem [shape: f32[1,128], index: 2, kind: input, shape index: {}]
  %s3 = inlined_call_operand.hbm [shape: f32[16,128], index: 3, kind: input, shape index: {}]
  %s4 = inlined_call_operand.hbm [shape: f32[16,128], index: 4, kind: output, shape index: {}]
  %s5 = sld [smem:[#allocation0]]
  $region38: #{tpu_custom_call.1} parent=0
    _
  %s7 = ssub.s32 1, %s5
  %s8 = scalar_select 0, %s7, %s5
  $region1: #{tpu_custom_call.1} parent=0
    #allocation2 [shape = 'u8[8192]{0}', space=vmem, size = 0x2000, scoped, tag = 'input window, operand 0, single buffered']
    #allocation3 [shape = 's32[1]{0}', space=sflag, size = 0x4, scoped, tag = 'scoped memory for tpu_custom_call.1']
    #allocation4 [shape = 's32[1]{0}', space=sflag, size = 0x4, scoped, tag = 'scoped memory for tpu_custom_call.1']
    #allocation5 [shape = 'u8[16384]{0}', space=vmem, size = 0x4000, scoped, tag = 'input window, operand 1, single buffered']
    #allocation6 [shape = 's32[1]{0}', space=sflag, size = 0x4, scoped, tag = 'scoped memory for tpu_custom_call.1']
    #allocation7 [shape = 'u8[8192]{0}', space=vmem, size = 0x2000, scoped, tag = 'input window, operand 3, single buffered']
    #allocation8 [shape = 'u8[8192]{0}', space=vmem, size = 0x2000, scoped, tag = 'output window, operand 0, single buffered']
    %9 = vsyncpa [#allocation3], 0
    %10 = vsyncpa [#allocation6], 0
    %11 = vsyncpa [#allocation4], 0
    // Predicated region
    $region2: #{tpu_custom_call.1} parent=1 // pred_check
      _
    $region3: #{tpu_custom_call.1} parent=1 // pred_check_branch
      %13 = sbr.rel (0) target = $region5
    $region4: #{tpu_custom_call.1} parent=1 // pred_region
      %15 = vsyncadd [#allocation3], 0
      %s16 = sshll.u32 %s0, 4
      %s17 = int_to_ptr.hbm [resolvable:$true] %s16
      %s18 = sshll.u32 [#allocation2], 4
      %s19 = int_to_ptr.vmem [resolvable:$true] %s18
      %24 = dma.hbm_to_vmem [thread:$0]  %s17, 256, %s19, [#allocation3], 128, 128, 8
    $region5: #{tpu_custom_call.1} parent=1 // pred_fallthru
      _
    // Predicated region
    $region6: #{tpu_custom_call.1} parent=1 // pred_check
      _
    $region7: #{tpu_custom_call.1} parent=1 // pred_check_branch
      %26 = sbr.rel (0) target = $region9
    $region8: #{tpu_custom_call.1} parent=1 // pred_region
      %28 = vsyncadd [#allocation6], 0
      %s29 = sshll.u32 %s1, 4
      %s30 = int_to_ptr.hbm [resolvable:$true] %s29
      %s31 = sshll.u32 [#allocation5], 4
      %s32 = int_to_ptr.vmem [resolvable:$true] %s31
      %37 = dma.hbm_to_vmem [thread:$0]  %s30, 512, %s32, [#allocation6], 128, 128, 8
    $region9: #{tpu_custom_call.1} parent=1 // pred_fallthru
      _
    // Predicated region
    $region10: #{tpu_custom_call.1} parent=1 // pred_check
      _
    $region11: #{tpu_custom_call.1} parent=1 // pred_check_branch
      %39 = sbr.rel (0) target = $region13
    $region12: #{tpu_custom_call.1} parent=1 // pred_region
      _
    $region13: #{tpu_custom_call.1} parent=1 // pred_fallthru
      _
    // Predicated region
    $region14: #{tpu_custom_call.1} parent=1 // pred_check
      _
    $region15: #{tpu_custom_call.1} parent=1 // pred_check_branch
      %41 = sbr.rel (0) target = $region17
    $region16: #{tpu_custom_call.1} parent=1 // pred_region
      %43 = vsyncadd [#allocation6], 0
      %s44 = sshll.u32 %s3, 4
      %s45 = int_to_ptr.hbm [resolvable:$true] %s44
      %s46 = sshll.u32 [#allocation7], 4
      %s47 = int_to_ptr.vmem [resolvable:$true] %s46
      %52 = dma.hbm_to_vmem [thread:$0]  %s45, 256, %s47, [#allocation6], 128, 128, 8
    $region17: #{tpu_custom_call.1} parent=1 // pred_fallthru
      _
    // Predicated region
    $region18: #{tpu_custom_call.1} parent=1 // pred_check
      _
    $region19: #{tpu_custom_call.1} parent=1 // pred_check_branch
      %54 = sbr.rel (0) target = $region21
    $region20: #{tpu_custom_call.1} parent=1 // pred_region
      %56 = dma.done [#allocation3], 256
    $region21: #{tpu_custom_call.1} parent=1 // pred_fallthru
      _
    // Predicated region
    $region22: #{tpu_custom_call.1} parent=1 // pred_check
      _
    $region23: #{tpu_custom_call.1} parent=1 // pred_check_branch
      %58 = sbr.rel (0) target = $region25
    $region24: #{tpu_custom_call.1} parent=1 // pred_region
      %60 = dma.done [#allocation6], 512
    $region25: #{tpu_custom_call.1} parent=1 // pred_fallthru
      _
    // Predicated region
    $region26: #{tpu_custom_call.1} parent=1 // pred_check
      _
    $region27: #{tpu_custom_call.1} parent=1 // pred_check_branch
      %62 = sbr.rel (0) target = $region29
    $region28: #{tpu_custom_call.1} parent=1 // pred_region
      %64 = dma.done [#allocation6], 256
    $region29: #{tpu_custom_call.1} parent=1 // pred_fallthru
      _
    %v65 = vld [vmem:[#allocation2] sm:$0xff]
    %v66 = vld [vmem:[#allocation2 + $0x8] sm:$0xff]
    %v67 = vld [vmem:[#allocation5] sm:$0xff]
    %v68 = vld [vmem:[#allocation5 + $0x8] sm:$0xff]
    %v69 = vld [vmem:[#allocation5 + $0x10] sm:$0xff]
    %v70 = vld [vmem:[#allocation5 + $0x18] sm:$0xff]
    %v71 = vld [vmem:[%s2] sm:$0x1]
    %v73 = vperm.slane %v71, 0
    %vm75 = vcmask 261120
    %v77 = vsel %vm75, %v65, 0
    %v80 = vsel %vm75, %v66, 0
    %82 = vmatpush.msra.mxu0 0.0
    %83 = vmatpush.msra.mxu0 0.0
    %84 = vmatpush.msra.mxu0 0.0
    %85 = vmatpush.msra.mxu0 0.0
    %86 = vmatpush.msra.mxu0 0.0
    %87 = vmatpush.msra.mxu0 0.0
    %88 = vmatpush.msra.mxu0 0.0
    %89 = vmatpush.msra.mxu0 0.0
    %90 = vmatpush.msra.mxu0 0.0
    %91 = vmatpush.msra.mxu0 0.0
    %92 = vmatpush.msra.mxu0 0.0
    %93 = vmatpush.msra.mxu0 0.0
    %94 = vmatpush.msra.mxu0 %v70
    %95 = vmatpush.msra.mxu0 %v69
    %96 = vmatpush.msra.mxu0 %v68
    %97 = vmatpush.msra.mxu0 %v67
    %98 = vmatmul.f32.gmra.mxu0 %v77
    %v99 = vpop.f32.mrf.mxu0
    %v100 = vadd.f32 %v73, %v99
    %101 = vmatmul.f32.gmra.mxu0 %v80
    %v102 = vpop.f32.mrf.mxu0
    %v103 = vadd.f32 %v73, %v102
    %104 = vdwg.mxu0
    %v105 = vld [vmem:[#allocation7] sm:$0xff]
    %v106 = vld [vmem:[#allocation7 + $0x8] sm:$0xff]
    %v107 = vmul.f32 %v100, %v105
    %v108 = vmul.f32 %v103, %v106
    %109 = vst [vmem:[#allocation8] sm:$0xff] %v107
    %110 = vst [vmem:[#allocation8 + $0x8] sm:$0xff] %v108
    // Predicated region
    $region30: #{tpu_custom_call.1} parent=1 // pred_check
      _
    $region31: #{tpu_custom_call.1} parent=1 // pred_check_branch
      %112 = sbr.rel (0) target = $region33
    $region32: #{tpu_custom_call.1} parent=1 // pred_region
      %114 = vsyncadd [#allocation4], 0
      %s115 = sshll.u32 [#allocation8], 4
      %s116 = int_to_ptr.vmem [resolvable:$true] %s115
      %s117 = sshll.u32 %s4, 4
      %s118 = int_to_ptr.hbm [resolvable:$true] %s117
      %123 = dma.vmem_to_hbm [thread:$0]  %s116, 256, %s118, [#allocation4], 128, 128, 8
    $region33: #{tpu_custom_call.1} parent=1 // pred_fallthru
      _
    // Predicated region
    $region34: #{tpu_custom_call.1} parent=1 // pred_check
      _
    $region35: #{tpu_custom_call.1} parent=1 // pred_check_branch
      %125 = sbr.rel (0) target = $region37
    $region36: #{tpu_custom_call.1} parent=1 // pred_region
      %127 = dma.done [#allocation4], 256
    $region37: #{tpu_custom_call.1} parent=1 // pred_fallthru
      _
    %128 = vsyncpa [#allocation3], 1
    %129 = vsyncpa [#allocation6], 1
    %130 = vsyncpa [#allocation4], 1

</llo_original>
